<compile_context>
chip_gen: v6e
topology: v6e:2x2x1
jax: 0.10.0
libtpu: 0.0.40
codegen_flags: <defaults>
</compile_context>

<pallas_src>
import jax
import jax.numpy as jnp
from jax import lax
from jax.experimental import pallas as pl
from jax.experimental.pallas import tpu as pltpu


DIMS = (144, 108, 72, 36, 18, 1)
LANES = 128

# Packed bf16 weight-slab row segments (all 8-aligned, full 128-lane width):
#   [  0:144) w1   (real 144x108)  K comes from x (144 cols, unpadded)
#   [144:272) w2   (real 108x72, K padded to 128 with zero rows)
#   [272:400) w3   (real  72x36)
#   [400:528) w4   (real  36x18)
#   [528:536) w5^T (real   1x18, row 528 only)
_W_SEGS = ((0, 144), (144, 272), (272, 400), (400, 528), (528, 536))
_W_ROWS = 536


def ffn_kernel(x_ref, w_ref, b_ref, o_ref):
    """One batch tile: x [tile,144] f32 -> o [1,tile] f32 (lane-dense output row).

    w_ref: [536,128] bf16 packed weights (layout in _W_SEGS), zero-padded so the
    padded activation lanes stay exactly 0 through every layer (tanh(0)=0).
    b_ref: [8,128] f32 packed biases (row l = bias of layer l, zero-padded lanes).
    """
    f32 = jnp.float32
    bf16 = jnp.bfloat16

    h = x_ref[...].astype(bf16)                                    # [tile, 144]

    # Hidden layers: bf16 x bf16 MXU matmuls with f32 accumulation; bias add and
    # tanh in f32; activations kept bf16 between layers.
    for layer, (r0, r1) in enumerate(_W_SEGS[:4]):
        z = jnp.dot(h, w_ref[r0:r1, :], preferred_element_type=f32)   # [tile, 128]
        h = jnp.tanh(z + b_ref[layer:layer + 1, :]).astype(bf16)

    # Final 18->1 layer computed "sideways" so the result row is lane-dense:
    #   y[0, b] = sum_k w5t[0, k] * h[b, k]
    # Lanes 18..127 of both operands are exactly zero, so they contribute nothing.
    w5t = w_ref[_W_SEGS[4][0]:_W_SEGS[4][0] + 1, :]                # [1, 128] bf16
    y = lax.dot_general(w5t, h, (((1,), (1,)), ((), ())),
                        preferred_element_type=f32)                # [1, tile]
    y = y + b_ref[4:5, 0:1]                                        # scalar b5 broadcast
    o_ref[...] = y.astype(o_ref.dtype)


def _round_up(x, m):
    return (x + m - 1) // m * m


def _num_tensorcores():
    """How many TensorCores share a Pallas 'parallel' grid axis on this device."""
    try:
        kind = jax.devices()[0].device_kind.lower()
    except Exception:  # pragma: no cover - defensive
        return 1
    # Single-TC inference chips: take the whole batch in one tile when it fits.
    single_tc = ("v5 lite", "v5e", "v6 lite", "v6e", "v2", "v3")
    if any(s in kind for s in single_tc):
        return 1
    # v7x (2 TC/chip) and megacore-style chips: keep >= 2 parallel grid steps.
    return 2


def _choose_tiling(B, batch_tile, n_cores):
    """Pick a 128-multiple batch tile; keep >= n_cores steps only on multi-TC chips."""
    B_aligned = _round_up(max(B, 1), LANES)          # lane-dense output rows
    tile = min(batch_tile, B_aligned)
    if n_cores > 1 and B_aligned >= 2 * LANES:
        tile = min(tile, _round_up(pl.cdiv(B_aligned, n_cores), LANES))
    tile = max(LANES, _round_up(tile, LANES))
    num_tiles = pl.cdiv(B_aligned, tile)
    if n_cores > 1 and num_tiles > 1 and num_tiles % n_cores:
        # Nudge to a core-count multiple of (roughly) equal-sized steps.
        target = _round_up(num_tiles, n_cores)
        tile = max(LANES, _round_up(pl.cdiv(B_aligned, target), LANES))
        num_tiles = pl.cdiv(B_aligned, tile)
    return tile, num_tiles, num_tiles * tile


def pack_params(params):
    """Pack 5 (w [in,out], b [1,out]) pairs into (bf16 weight slab, f32 bias slab)."""
    assert len(params) == 5

    def pad_to(a, rows, cols=LANES):
        r, c = a.shape
        return jnp.pad(a, ((0, rows - r), (0, cols - c)))

    (w1, b1), (w2, b2), (w3, b3), (w4, b4), (w5, b5) = params
    wpack = jnp.concatenate(
        [pad_to(w1, 144),           # K = 144 (from x)
         pad_to(w2, 128),           # K padded to 128 (activation lanes)
         pad_to(w3, 128),
         pad_to(w4, 128),
         pad_to(w5.T, 8)],          # w5^T as a single lane-major row
        axis=0).astype(jnp.bfloat16)
    assert wpack.shape == (_W_ROWS, LANES)

    bpack = jnp.concatenate(
        [pad_to(b1, 1), pad_to(b2, 1), pad_to(b3, 1), pad_to(b4, 1), pad_to(b5, 1),
         jnp.zeros((3, LANES), jnp.float32)],
        axis=0).astype(jnp.float32)                               # [8, 128]
    return wpack, bpack


def ffn_forward(x, params, *, batch_tile=4096):
    """x: [B, 144] float32.  params: list of (w [in,out], b [1,out]).  Returns [B, 1]."""
    B, F = x.shape
    assert F == DIMS[0] and len(params) == 5 and params[-1][0].shape[1] == 1

    # In a real model the packed slabs would be prepared once; they are ~105 KiB.
    wpack, bpack = pack_params(params)

    n_cores = _num_tensorcores()
    tile, num_tiles, B_pad = _choose_tiling(B, batch_tile, n_cores)
    x_p = x if B_pad == B else jnp.pad(x, ((0, B_pad - B), (0, 0)))

    # Advisory cost estimate (scheduler hint only; not tuned against).
    flops = 2 * B_pad * sum(di * do for di, do in zip(DIMS[:-1], DIMS[1:]))
    transcendentals = B_pad * sum(DIMS[1:-1])                      # tanh count
    bytes_accessed = (x_p.size * x_p.dtype.itemsize
                      + wpack.size * wpack.dtype.itemsize
                      + bpack.size * bpack.dtype.itemsize
                      + B_pad * x.dtype.itemsize)

    out = pl.pallas_call(
        ffn_kernel,
        out_shape=jax.ShapeDtypeStruct((num_tiles, tile), x.dtype),
        grid_spec=pltpu.PrefetchScalarGridSpec(
            num_scalar_prefetch=0,
            grid=(num_tiles,),
            in_specs=[
                # x: streamed per batch tile, full feature dim.
                pl.BlockSpec((tile, F), lambda i: (i, 0)),
                # Packed weights / biases: VMEM-resident, same block every step.
                pl.BlockSpec(wpack.shape, lambda i: (0, 0)),
                pl.BlockSpec(bpack.shape, lambda i: (0, 0)),
            ],
            # Lane-dense output: one [1, tile] row per grid step (unmasked vst).
            out_specs=pl.BlockSpec((1, tile), lambda i: (i, 0)),
        ),
        compiler_params=pltpu.CompilerParams(
            dimension_semantics=("parallel",),
        ),
        cost_estimate=pl.CostEstimate(
            flops=int(flops),
            transcendentals=int(transcendentals),
            bytes_accessed=int(bytes_accessed),
        ),
    )(x_p, wpack, bpack)

    # [num_tiles, tile] row-major == batch order -> [B, 1]
    return out.reshape(B_pad, 1)[:B]


def init_params(key, dims):
    """Deterministic init mimicking torch nn.Linear: U(-1/sqrt(in), 1/sqrt(in))."""
    params = []
    for d_in, d_out in zip(dims[:-1], dims[1:]):
        key, kw, kb = jax.random.split(key, 3)
        bound = 1.0 / jnp.sqrt(jnp.float32(d_in))
        w = jax.random.uniform(kw, (d_in, d_out), jnp.float32, -bound, bound)
        b = jax.random.uniform(kb, (1, d_out), jnp.float32, -bound, bound)
        params.append((w, b))
    return params


def ffn_reference(x, params):
    h = x
    for i, (w, b) in enumerate(params):
        h = h @ w + b
        if i < len(params) - 1:
            h = jnp.tanh(h)
    return h


if __name__ == "__main__":
    key = jax.random.PRNGKey(0)
    k_params, k_x1, k_x2 = jax.random.split(key, 3)
    params = init_params(k_params, DIMS)

    # Tolerance is relaxed vs. the f32 reference because the kernel uses bf16 MXU
    # operands / bf16 inter-layer activations (f32 accumulation, bias, tanh).
    TOL = dict(atol=3e-2, rtol=3e-2)

    # Small smoke test (single 128-row tile; B=8 is zero-padded to 128 internally).
    B = 8
    x = jax.random.normal(k_x1, (B, 144), jnp.float32)
    out = jax.block_until_ready(ffn_forward(x, params))
    ref = ffn_reference(x, params)
    assert out.shape == (B, 1)
    assert jnp.allclose(out, ref, **TOL), "mismatch vs reference (B=8)"

    # Ragged batch exercising the padded, multi-step grid path (tile forced to 128).
    B2 = 300
    x2 = jax.random.normal(k_x2, (B2, 144), jnp.float32)
    out2 = jax.block_until_ready(ffn_forward(x2, params, batch_tile=128))
    ref2 = ffn_reference(x2, params)
    assert out2.shape == (B2, 1)
    assert jnp.allclose(out2, ref2, **TOL), "mismatch vs reference (B=300)"

    print("KERNEL_OK")
</pallas_src>

<mosaic_0001>
module attributes {stable_mosaic.version = 11 : i64} {
  func.func @ffn_kernel(%arg0: i32, %arg1: memref<128x144xf32, #tpu.memory_space<vmem>>, %arg2: memref<536x128xbf16, #tpu.memory_space<vmem>>, %arg3: memref<8x128xf32, #tpu.memory_space<vmem>>, %arg4: memref<1x128xf32, #tpu.memory_space<vmem>>) attributes {dimension_semantics = [#tpu.dimension_semantics<parallel>], iteration_bounds = array<i64: 1>, scalar_prefetch = 0 : i64, scratch_operands = 0 : i64, tpu.core_type = #tpu.core_type<tc>, window_params = [{transform_indices = @transform_0, window_bounds = array<i64: 128, 144>}, {pipeline_mode = #tpu.pipeline_mode<synchronous>, transform_indices = @transform_1, window_bounds = array<i64: 536, 128>}, {pipeline_mode = #tpu.pipeline_mode<synchronous>, transform_indices = @transform_2, window_bounds = array<i64: 8, 128>}, {transform_indices = @transform_3, window_bounds = array<i64: 1, 128>}]} {
    %c0 = arith.constant 0 : index
    %c0_0 = arith.constant 0 : index
    %0 = vector.load %arg1[%c0, %c0_0] : memref<128x144xf32, #tpu.memory_space<vmem>>, vector<128x144xf32>
    %1 = arith.truncf %0 : vector<128x144xf32> to vector<128x144xbf16>
    %c0_1 = arith.constant 0 : index
    %c0_2 = arith.constant 0 : index
    %2 = vector.load %arg2[%c0_1, %c0_2] : memref<536x128xbf16, #tpu.memory_space<vmem>>, vector<144x128xbf16>
    %cst = arith.constant dense<0.000000e+00> : vector<128x128xf32>
    %3 = tpu.matmul %1, %2, %cst {dimension_numbers = #tpu.dot_dimension_numbers<[1], [0], [0], [1], [0, 0, 1, 1], [], []>} : vector<128x144xbf16>, vector<144x128xbf16>, vector<128x128xf32> -> vector<128x128xf32>
    %c0_3 = arith.constant 0 : index
    %c0_4 = arith.constant 0 : index
    %4 = vector.load %arg3[%c0_3, %c0_4] : memref<8x128xf32, #tpu.memory_space<vmem>>, vector<1x128xf32>
    %5 = vector.broadcast %4 : vector<1x128xf32> to vector<128x128xf32>
    %6 = arith.addf %3, %5 : vector<128x128xf32>
    %7 = math.tanh %6 : vector<128x128xf32>
    %8 = arith.truncf %7 : vector<128x128xf32> to vector<128x128xbf16>
    %c144 = arith.constant 144 : index
    %c0_5 = arith.constant 0 : index
    %9 = vector.load %arg2[%c144, %c0_5] : memref<536x128xbf16, #tpu.memory_space<vmem>>, vector<128x128xbf16>
    %cst_6 = arith.constant dense<0.000000e+00> : vector<128x128xf32>
    %10 = tpu.matmul %8, %9, %cst_6 {dimension_numbers = #tpu.dot_dimension_numbers<[1], [0], [0], [1], [0, 0, 1, 1], [], []>} : vector<128x128xbf16>, vector<128x128xbf16>, vector<128x128xf32> -> vector<128x128xf32>
    %c1 = arith.constant 1 : index
    %c0_7 = arith.constant 0 : index
    %11 = vector.load %arg3[%c1, %c0_7] : memref<8x128xf32, #tpu.memory_space<vmem>>, vector<1x128xf32>
    %12 = vector.broadcast %11 : vector<1x128xf32> to vector<128x128xf32>
    %13 = arith.addf %10, %12 : vector<128x128xf32>
    %14 = math.tanh %13 : vector<128x128xf32>
    %15 = arith.truncf %14 : vector<128x128xf32> to vector<128x128xbf16>
    %c272 = arith.constant 272 : index
    %c0_8 = arith.constant 0 : index
    %16 = vector.load %arg2[%c272, %c0_8] : memref<536x128xbf16, #tpu.memory_space<vmem>>, vector<128x128xbf16>
    %cst_9 = arith.constant dense<0.000000e+00> : vector<128x128xf32>
    %17 = tpu.matmul %15, %16, %cst_9 {dimension_numbers = #tpu.dot_dimension_numbers<[1], [0], [0], [1], [0, 0, 1, 1], [], []>} : vector<128x128xbf16>, vector<128x128xbf16>, vector<128x128xf32> -> vector<128x128xf32>
    %c2 = arith.constant 2 : index
    %c0_10 = arith.constant 0 : index
    %18 = vector.load %arg3[%c2, %c0_10] : memref<8x128xf32, #tpu.memory_space<vmem>>, vector<1x128xf32>
    %19 = vector.broadcast %18 : vector<1x128xf32> to vector<128x128xf32>
    %20 = arith.addf %17, %19 : vector<128x128xf32>
    %21 = math.tanh %20 : vector<128x128xf32>
    %22 = arith.truncf %21 : vector<128x128xf32> to vector<128x128xbf16>
    %c400 = arith.constant 400 : index
    %c0_11 = arith.constant 0 : index
    %23 = vector.load %arg2[%c400, %c0_11] : memref<536x128xbf16, #tpu.memory_space<vmem>>, vector<128x128xbf16>
    %cst_12 = arith.constant dense<0.000000e+00> : vector<128x128xf32>
    %24 = tpu.matmul %22, %23, %cst_12 {dimension_numbers = #tpu.dot_dimension_numbers<[1], [0], [0], [1], [0, 0, 1, 1], [], []>} : vector<128x128xbf16>, vector<128x128xbf16>, vector<128x128xf32> -> vector<128x128xf32>
    %c3 = arith.constant 3 : index
    %c0_13 = arith.constant 0 : index
    %25 = vector.load %arg3[%c3, %c0_13] : memref<8x128xf32, #tpu.memory_space<vmem>>, vector<1x128xf32>
    %26 = vector.broadcast %25 : vector<1x128xf32> to vector<128x128xf32>
    %27 = arith.addf %24, %26 : vector<128x128xf32>
    %28 = math.tanh %27 : vector<128x128xf32>
    %29 = arith.truncf %28 : vector<128x128xf32> to vector<128x128xbf16>
    %c528 = arith.constant 528 : index
    %c0_14 = arith.constant 0 : index
    %30 = vector.load %arg2[%c528, %c0_14] : memref<536x128xbf16, #tpu.memory_space<vmem>>, vector<1x128xbf16>
    %cst_15 = arith.constant dense<0.000000e+00> : vector<1x128xf32>
    %31 = tpu.matmul %30, %29, %cst_15 {dimension_numbers = #tpu.dot_dimension_numbers<[1], [1], [0], [0], [0, 0, 1, 0], [], []>} : vector<1x128xbf16>, vector<128x128xbf16>, vector<1x128xf32> -> vector<1x128xf32>
    %c4 = arith.constant 4 : index
    %c0_16 = arith.constant 0 : index
    %32 = vector.load %arg3[%c4, %c0_16] : memref<8x128xf32, #tpu.memory_space<vmem>>, vector<1x1xf32>
    %33 = vector.broadcast %32 : vector<1x1xf32> to vector<1x128xf32>
    %34 = arith.addf %31, %33 : vector<1x128xf32>
    %c0_17 = arith.constant 0 : index
    %c0_18 = arith.constant 0 : index
    %35 = vector.load %arg4[%c0_17, %c0_18] : memref<1x128xf32, #tpu.memory_space<vmem>>, vector<1x128xf32>
    tpu.vector_store %arg4[%c0_17, %c0_18], %34 {strides = array<i32>} : memref<1x128xf32, #tpu.memory_space<vmem>>, vector<1x128xf32>,
    return
  }
  func.func @transform_0(%arg0: i32) -> (i32, i32) {
    %c0_i32 = arith.constant 0 : i32
    %c0_i32_0 = arith.constant 0 : i32
    return %arg0, %c0_i32 : i32, i32
  }
  func.func @transform_1(%arg0: i32) -> (i32, i32) {
    %c0_i32 = arith.constant 0 : i32
    %c0_i32_0 = arith.constant 0 : i32
    %c0_i32_1 = arith.constant 0 : i32
    return %c0_i32, %c0_i32_0 : i32, i32
  }
  func.func @transform_2(%arg0: i32) -> (i32, i32) {
    %c0_i32 = arith.constant 0 : i32
    %c0_i32_0 = arith.constant 0 : i32
    %c0_i32_1 = arith.constant 0 : i32
    return %c0_i32, %c0_i32_0 : i32, i32
  }
  func.func @transform_3(%arg0: i32) -> (i32, i32) {
    %c0_i32 = arith.constant 0 : i32
    %c0_i32_0 = arith.constant 0 : i32
    return %arg0, %c0_i32 : i32, i32
  }
}

</mosaic_0001>

<llo_original>
// kernel: tpu_custom_call.1
$region0: #{tpu_custom_call.1}
  #allocation0 [shape = 'u32[]', space=smem, size = 0x4, offset = 0x4, fixed_abs, tag = 'smem constant byte address 0x4 - core index']
  #allocation1 [shape = 'u32[144,128]{1,0:T(1,128)}', space=vmem, size = 0x12000, scoped, tag = 'internal scratch']
  %s0 = inlined_call_operand.vmem [shape: f32[128,144], index: 0, kind: input, shape index: {}]
  %s1 = inlined_call_operand.vmem [shape: bf16[536,128], index: 1, kind: input, shape index: {}]
  %s2 = inlined_call_operand.vmem [shape: f32[8,128], index: 2, kind: input, shape index: {}]
  %s3 = inlined_call_operand.hbm [shape: f32[1,128], index: 3, kind: output, shape index: {}]
  %s4 = sld [smem:[#allocation0]]
  $region22: #{tpu_custom_call.1} parent=0
    _
  %s6 = ssub.s32 1, %s4
  %s7 = scalar_select 0, %s6, %s4
  $region1: #{tpu_custom_call.1} parent=0
    #allocation2 [shape = 'u8[512]{0}', space=vmem, size = 0x400, scoped, tag = 'output window, operand 0, single buffered']
    #allocation3 [shape = 's32[1]{0}', space=sflag, size = 0x4, scoped, tag = 'scoped memory for tpu_custom_call.1']
    %8 = vsyncpa [#allocation3], 0
    // Predicated region
    $region2: #{tpu_custom_call.1} parent=1 // pred_check
      _
    $region3: #{tpu_custom_call.1} parent=1 // pred_check_branch
      %10 = sbr.rel (0) target = $region5
    $region4: #{tpu_custom_call.1} parent=1 // pred_region
      _
    $region5: #{tpu_custom_call.1} parent=1 // pred_fallthru
      _
    // Predicated region
    $region6: #{tpu_custom_call.1} parent=1 // pred_check
      _
    $region7: #{tpu_custom_call.1} parent=1 // pred_check_branch
      %12 = sbr.rel (0) target = $region9
    $region8: #{tpu_custom_call.1} parent=1 // pred_region
      _
    $region9: #{tpu_custom_call.1} parent=1 // pred_fallthru
      _
    // Predicated region
    $region10: #{tpu_custom_call.1} parent=1 // pred_check
      _
    $region11: #{tpu_custom_call.1} parent=1 // pred_check_branch
      %14 = sbr.rel (0) target = $region13
    $region12: #{tpu_custom_call.1} parent=1 // pred_region
      _
    $region13: #{tpu_custom_call.1} parent=1 // pred_fallthru
      _
    %v16 = vld [vmem:[%s0] sm:$0xff]
    %v17 = vld [vmem:[%s0 + $0x8] sm:$0xff]
    %v18 = vld [vmem:[%s0 + $0x10] sm:$0xff]
    %v19 = vld [vmem:[%s0 + $0x18] sm:$0xff]
    %v20 = vld [vmem:[%s0 + $0x20] sm:$0xff]
    %v21 = vld [vmem:[%s0 + $0x28] sm:$0xff]
    %v22 = vld [vmem:[%s0 + $0x30] sm:$0xff]
    %v23 = vld [vmem:[%s0 + $0x38] sm:$0xff]
    %v24 = vld [vmem:[%s0 + $0x40] sm:$0xff]
    %v25 = vld [vmem:[%s0 + $0x48] sm:$0xff]
    %v26 = vld [vmem:[%s0 + $0x50] sm:$0xff]
    %v27 = vld [vmem:[%s0 + $0x58] sm:$0xff]
    %v28 = vld [vmem:[%s0 + $0x60] sm:$0xff]
    %v29 = vld [vmem:[%s0 + $0x68] sm:$0xff]
    %v30 = vld [vmem:[%s0 + $0x70] sm:$0xff]
    %v31 = vld [vmem:[%s0 + $0x78] sm:$0xff]
    %v32 = vld [vmem:[%s0 + $0x80] sm:$0xff]
    %v33 = vld [vmem:[%s0 + $0x88] sm:$0xff]
    %v34 = vld [vmem:[%s0 + $0x90] sm:$0xff]
    %v35 = vld [vmem:[%s0 + $0x98] sm:$0xff]
    %v36 = vld [vmem:[%s0 + $0xa0] sm:$0xff]
    %v37 = vld [vmem:[%s0 + $0xa8] sm:$0xff]
    %v38 = vld [vmem:[%s0 + $0xb0] sm:$0xff]
    %v39 = vld [vmem:[%s0 + $0xb8] sm:$0xff]
    %v40 = vld [vmem:[%s0 + $0xc0] sm:$0xff]
    %v41 = vld [vmem:[%s0 + $0xc8] sm:$0xff]
    %v42 = vld [vmem:[%s0 + $0xd0] sm:$0xff]
    %v43 = vld [vmem:[%s0 + $0xd8] sm:$0xff]
    %v44 = vld [vmem:[%s0 + $0xe0] sm:$0xff]
    %v45 = vld [vmem:[%s0 + $0xe8] sm:$0xff]
    %v46 = vld [vmem:[%s0 + $0xf0] sm:$0xff]
    %v47 = vld [vmem:[%s0 + $0xf8] sm:$0xff]
    %v48 = vpack.c.bf16 %v18, %v16
    %v49 = vpack.c.bf16 %v19, %v17
    %v50 = vpack.c.bf16 %v22, %v20
    %v51 = vpack.c.bf16 %v23, %v21
    %v52 = vpack.c.bf16 %v26, %v24
    %v53 = vpack.c.bf16 %v27, %v25
    %v54 = vpack.c.bf16 %v30, %v28
    %v55 = vpack.c.bf16 %v31, %v29
    %v56 = vpack.c.bf16 %v34, %v32
    %v57 = vpack.c.bf16 %v35, %v33
    %v58 = vpack.c.bf16 %v38, %v36
    %v59 = vpack.c.bf16 %v39, %v37
    %v60 = vpack.c.bf16 %v42, %v40
    %v61 = vpack.c.bf16 %v43, %v41
    %v62 = vpack.c.bf16 %v46, %v44
    %v63 = vpack.c.bf16 %v47, %v45
    %v64 = vld [vmem:[%s1] sm:$0xf]
    %v65 = vld [vmem:[%s1 + $0x4] sm:$0xf]
    %v66 = vld [vmem:[%s1 + $0x8] sm:$0xf]
    %v67 = vld [vmem:[%s1 + $0xc] sm:$0xf]
    %v68 = vld [vmem:[%s1 + $0x10] sm:$0xf]
    %v69 = vld [vmem:[%s1 + $0x14] sm:$0xf]
    %v70 = vld [vmem:[%s1 + $0x18] sm:$0xf]
    %v71 = vld [vmem:[%s1 + $0x1c] sm:$0xf]
    %v72 = vld [vmem:[%s1 + $0x20] sm:$0xf]
    %v73 = vld [vmem:[%s1 + $0x24] sm:$0xf]
    %v74 = vld [vmem:[%s1 + $0x28] sm:$0xf]
    %v75 = vld [vmem:[%s1 + $0x2c] sm:$0xf]
    %v76 = vld [vmem:[%s1 + $0x30] sm:$0xf]
    %v77 = vld [vmem:[%s1 + $0x34] sm:$0xf]
    %v78 = vld [vmem:[%s1 + $0x38] sm:$0xf]
    %v79 = vld [vmem:[%s1 + $0x3c] sm:$0xf]
    %v80 = vld [vmem:[%s1 + $0x40] sm:$0xf]
    %v81 = vld [vmem:[%s1 + $0x44] sm:$0xf]
    %v82 = vld [vmem:[%s2] sm:$0x1]
    %v83 = vlaneseq
    %v84 = vshrl.u32 %v83, 7
    %v85 = vsub.s32 0, %v84
    %v86 = vrot.slane %v82, %v85
    %v105 = vunpack.c.l.b16 %v64
    %v106 = vunpack.c.l.b16 %v65
    %v107 = vunpack.c.l.b16 %v66
    %v108 = vunpack.c.l.b16 %v67
    %v109 = vunpack.c.l.b16 %v68
    %v110 = vunpack.c.l.b16 %v69
    %v111 = vunpack.c.l.b16 %v70
    %v112 = vunpack.c.l.b16 %v71
    %v113 = vunpack.c.l.b16 %v72
    %v114 = vunpack.c.l.b16 %v73
    %v115 = vunpack.c.l.b16 %v74
    %v116 = vunpack.c.l.b16 %v75
    %v117 = vunpack.c.l.b16 %v76
    %v118 = vunpack.c.l.b16 %v77
    %v119 = vunpack.c.l.b16 %v78
    %v120 = vunpack.c.l.b16 %v79
    %v121 = vunpack.c.l.b16 %v80
    %v122 = vunpack.c.l.b16 %v81
    %v123 = vpack.c.b16 %v106, %v105
    %v124 = vpack.c.b16 %v108, %v107
    %v125 = vpack.c.b16 %v110, %v109
    %v126 = vpack.c.b16 %v112, %v111
    %v127 = vpack.c.b16 %v114, %v113
    %v128 = vpack.c.b16 %v116, %v115
    %v129 = vpack.c.b16 %v118, %v117
    %v130 = vpack.c.b16 %v120, %v119
    %v131 = vpack.c.b16 %v122, %v121
    %vm141 = vcmask 130048
    %v143 = vsel %vm141, %v49, 0
    %v146 = vsel %vm141, %v51, 0
    %v149 = vsel %vm141, %v53, 0
    %v152 = vsel %vm141, %v55, 0
    %v155 = vsel %vm141, %v57, 0
    %v158 = vsel %vm141, %v59, 0
    %v161 = vsel %vm141, %v61, 0
    %v164 = vsel %vm141, %v63, 0
    %166 = vmatprep.subr.bf16.mxu0 0
    %167 = vmatpush1.bf16.msra.mxu0 %v130
    %168 = vmatprep.subr.bf16.mxu0 0
    %169 = vmatpush1.bf16.msra.mxu0 %v129
    %170 = vmatprep.subr.bf16.mxu0 0
    %171 = vmatpush1.bf16.msra.mxu0 %v128
    %172 = vmatprep.subr.bf16.mxu0 0
    %173 = vmatpush1.bf16.msra.mxu0 %v127
    %174 = vmatprep.subr.bf16.mxu0 0
    %175 = vmatpush1.bf16.msra.mxu0 %v126
    %176 = vmatprep.subr.bf16.mxu0 0
    %177 = vmatpush1.bf16.msra.mxu0 %v125
    %178 = vmatprep.subr.bf16.mxu0 0
    %179 = vmatpush1.bf16.msra.mxu0 %v124
    %180 = vmatprep.subr.bf16.mxu0 0
    %181 = vmatpush1.bf16.msra.mxu0 %v123
    %182 = vmatprep.subr.bf16.mxu0 0
    %183 = vmatpush2.bf16.msra.mxu0 0
    %184 = vmatprep.subr.bf16.mxu0 0
    %185 = vmatpush2.bf16.msra.mxu0 0
    %186 = vmatprep.subr.bf16.mxu0 0
    %187 = vmatpush2.bf16.msra.mxu0 0
    %188 = vmatprep.subr.bf16.mxu0 0
    %189 = vmatpush2.bf16.msra.mxu0 0
    %190 = vmatprep.subr.bf16.mxu0 0
    %191 = vmatpush2.bf16.msra.mxu0 0
    %192 = vmatprep.subr.bf16.mxu0 0
    %193 = vmatpush2.bf16.msra.mxu0 0
    %194 = vmatprep.subr.bf16.mxu0 0
    %195 = vmatpush2.bf16.msra.mxu0 0
    %196 = vmatprep.subr.bf16.mxu0 0
    %197 = vmatpush2.bf16.msra.mxu0 %v131
    %198 = vmatprep.mubr.bf16.mxu0 %v143
    %199 = vmatmul.mubr.bf16.gmra.mxu0 %v48
    %v200 = vpop.f32.mrf.mxu0
    %v201 = vadd.f32 %v86, %v200
    %v202 = vpop.f32.mrf.mxu0
    %v203 = vpop.f32.mrf.mxu0
    %v204 = vadd.f32 %v86, %v203
    %v205 = vpop.f32.mrf.mxu0
    %206 = vmatprep.mubr.bf16.mxu0 %v146
    %207 = vmatmul.mubr.bf16.gmra.mxu0 %v50
    %v208 = vpop.f32.mrf.mxu0
    %v209 = vadd.f32 %v86, %v208
    %v210 = vpop.f32.mrf.mxu0
    %v211 = vpop.f32.mrf.mxu0
    %v212 = vadd.f32 %v86, %v211
    %v213 = vpop.f32.mrf.mxu0
    %214 = vmatprep.mubr.bf16.mxu0 %v149
    %215 = vmatmul.mubr.bf16.gmra.mxu0 %v52
    %v216 = vpop.f32.mrf.mxu0
    %v217 = vadd.f32 %v86, %v216
    %v218 = vpop.f32.mrf.mxu0
    %v219 = vpop.f32.mrf.mxu0
    %v220 = vadd.f32 %v86, %v219
    %v221 = vpop.f32.mrf.mxu0
    %222 = vmatprep.mubr.bf16.mxu0 %v152
    %223 = vmatmul.mubr.bf16.gmra.mxu0 %v54
    %v224 = vpop.f32.mrf.mxu0
    %v225 = vadd.f32 %v86, %v224
    %v226 = vpop.f32.mrf.mxu0
    %v227 = vpop.f32.mrf.mxu0
    %v228 = vadd.f32 %v86, %v227
    %v229 = vpop.f32.mrf.mxu0
    %230 = vmatprep.mubr.bf16.mxu0 %v155
    %231 = vmatmul.mubr.bf16.gmra.mxu0 %v56
    %v232 = vpop.f32.mrf.mxu0
    %v233 = vadd.f32 %v86, %v232
    %v234 = vpop.f32.mrf.mxu0
    %v235 = vpop.f32.mrf.mxu0
    %v236 = vadd.f32 %v86, %v235
    %v237 = vpop.f32.mrf.mxu0
    %238 = vmatprep.mubr.bf16.mxu0 %v158
    %239 = vmatmul.mubr.bf16.gmra.mxu0 %v58
    %v240 = vpop.f32.mrf.mxu0
    %v241 = vadd.f32 %v86, %v240
    %v242 = vpop.f32.mrf.mxu0
    %v243 = vpop.f32.mrf.mxu0
    %v244 = vadd.f32 %v86, %v243
    %v245 = vpop.f32.mrf.mxu0
    %246 = vmatprep.mubr.bf16.mxu0 %v161
    %247 = vmatmul.mubr.bf16.gmra.mxu0 %v60
    %v248 = vpop.f32.mrf.mxu0
    %v249 = vadd.f32 %v86, %v248
    %v250 = vpop.f32.mrf.mxu0
    %v251 = vpop.f32.mrf.mxu0
    %v252 = vadd.f32 %v86, %v251
    %v253 = vpop.f32.mrf.mxu0
    %254 = vmatprep.mubr.bf16.mxu0 %v164
    %255 = vmatmul.mubr.bf16.gmra.mxu0 %v62
    %v256 = vpop.f32.mrf.mxu0
    %v257 = vadd.f32 %v86, %v256
    %v258 = vpop.f32.mrf.mxu0
    %v259 = vpop.f32.mrf.mxu0
    %v260 = vadd.f32 %v86, %v259
    %v261 = vpop.f32.mrf.mxu0
    %262 = vdwg.mxu0
    %v263 = vtanh.pop %v201
    %v264 = vtanh.pop %v204
    %v265 = vtanh.pop %v209
    %v266 = vtanh.pop %v212
    %v267 = vtanh.pop %v217
    %v268 = vtanh.pop %v220
    %v269 = vtanh.pop %v225
    %v270 = vtanh.pop %v228
    %v271 = vtanh.pop %v233
    %v272 = vtanh.pop %v236
    %v273 = vtanh.pop %v241
    %v274 = vtanh.pop %v244
    %v275 = vtanh.pop %v249
    %v276 = vtanh.pop %v252
    %v277 = vtanh.pop %v257
    %v278 = vtanh.pop %v260
    %v279 = vpack.c.bf16 %v264, %v263
    %v280 = vpack.c.bf16 %v266, %v265
    %v281 = vpack.c.bf16 %v268, %v267
    %v282 = vpack.c.bf16 %v270, %v269
    %v283 = vpack.c.bf16 %v272, %v271
    %v284 = vpack.c.bf16 %v274, %v273
    %v285 = vpack.c.bf16 %v276, %v275
    %v286 = vpack.c.bf16 %v278, %v277
    %v287 = vld [vmem:[%s1 + $0x48] sm:$0xf]
    %v288 = vld [vmem:[%s1 + $0x4c] sm:$0xf]
    %v289 = vld [vmem:[%s1 + $0x50] sm:$0xf]
    %v290 = vld [vmem:[%s1 + $0x54] sm:$0xf]
    %v291 = vld [vmem:[%s1 + $0x58] sm:$0xf]
    %v292 = vld [vmem:[%s1 + $0x5c] sm:$0xf]
    %v293 = vld [vmem:[%s1 + $0x60] sm:$0xf]
    %v294 = vld [vmem:[%s1 + $0x64] sm:$0xf]
    %v295 = vld [vmem:[%s1 + $0x68] sm:$0xf]
    %v296 = vld [vmem:[%s1 + $0x6c] sm:$0xf]
    %v297 = vld [vmem:[%s1 + $0x70] sm:$0xf]
    %v298 = vld [vmem:[%s1 + $0x74] sm:$0xf]
    %v299 = vld [vmem:[%s1 + $0x78] sm:$0xf]
    %v300 = vld [vmem:[%s1 + $0x7c] sm:$0xf]
    %v301 = vld [vmem:[%s1 + $0x80] sm:$0xf]
    %v302 = vld [vmem:[%s1 + $0x84] sm:$0xf]
    %v303 = vld [vmem:[%s2 + $0x1] sm:$0x1]
    %v304 = vlaneseq
    %v305 = vshrl.u32 %v304, 7
    %v306 = vsub.s32 0, %v305
    %v307 = vrot.slane %v303, %v306
    %v324 = vunpack.c.l.b16 %v287
    %v325 = vunpack.c.l.b16 %v288
    %v326 = vunpack.c.l.b16 %v289
    %v327 = vunpack.c.l.b16 %v290
    %v328 = vunpack.c.l.b16 %v291
    %v329 = vunpack.c.l.b16 %v292
    %v330 = vunpack.c.l.b16 %v293
    %v331 = vunpack.c.l.b16 %v294
    %v332 = vunpack.c.l.b16 %v295
    %v333 = vunpack.c.l.b16 %v296
    %v334 = vunpack.c.l.b16 %v297
    %v335 = vunpack.c.l.b16 %v298
    %v336 = vunpack.c.l.b16 %v299
    %v337 = vunpack.c.l.b16 %v300
    %v338 = vunpack.c.l.b16 %v301
    %v339 = vunpack.c.l.b16 %v302
    %v340 = vpack.c.b16 %v325, %v324
    %v341 = vpack.c.b16 %v327, %v326
    %v342 = vpack.c.b16 %v329, %v328
    %v343 = vpack.c.b16 %v331, %v330
    %v344 = vpack.c.b16 %v333, %v332
    %v345 = vpack.c.b16 %v335, %v334
    %v346 = vpack.c.b16 %v337, %v336
    %v347 = vpack.c.b16 %v339, %v338
    %356 = vmatprep.subr.bf16.mxu0 0
    %357 = vmatpush1.bf16.msra.mxu0 %v347
    %358 = vmatprep.subr.bf16.mxu0 0
    %359 = vmatpush1.bf16.msra.mxu0 %v346
    %360 = vmatprep.subr.bf16.mxu0 0
    %361 = vmatpush1.bf16.msra.mxu0 %v345
    %362 = vmatprep.subr.bf16.mxu0 0
    %363 = vmatpush1.bf16.msra.mxu0 %v344
    %364 = vmatprep.subr.bf16.mxu0 0
    %365 = vmatpush1.bf16.msra.mxu0 %v343
    %366 = vmatprep.subr.bf16.mxu0 0
    %367 = vmatpush1.bf16.msra.mxu0 %v342
    %368 = vmatprep.subr.bf16.mxu0 0
    %369 = vmatpush1.bf16.msra.mxu0 %v341
    %370 = vmatprep.subr.bf16.mxu0 0
    %371 = vmatpush1.bf16.msra.mxu0 %v340
    %372 = vmatprep.subr.bf16.mxu0 0
    %373 = vmatpush2.bf16.msra.mxu0 0
    %374 = vmatprep.subr.bf16.mxu0 0
    %375 = vmatpush2.bf16.msra.mxu0 0
    %376 = vmatprep.subr.bf16.mxu0 0
    %377 = vmatpush2.bf16.msra.mxu0 0
    %378 = vmatprep.subr.bf16.mxu0 0
    %379 = vmatpush2.bf16.msra.mxu0 0
    %380 = vmatprep.subr.bf16.mxu0 0
    %381 = vmatpush2.bf16.msra.mxu0 0
    %382 = vmatprep.subr.bf16.mxu0 0
    %383 = vmatpush2.bf16.msra.mxu0 0
    %384 = vmatprep.subr.bf16.mxu0 0
    %385 = vmatpush2.bf16.msra.mxu0 0
    %386 = vmatprep.subr.bf16.mxu0 0
    %387 = vmatpush2.bf16.msra.mxu0 0
    %388 = vmatprep.mubr.bf16.mxu0 0
    %389 = vmatmul.mubr.bf16.gmra.mxu0 %v279
    %v390 = vpop.f32.mrf.mxu0
    %v391 = vadd.f32 %v307, %v390
    %v392 = vpop.f32.mrf.mxu0
    %v393 = vpop.f32.mrf.mxu0
    %v394 = vadd.f32 %v307, %v393
    %v395 = vpop.f32.mrf.mxu0
    %396 = vmatprep.mubr.bf16.mxu0 0
    %397 = vmatmul.mubr.bf16.gmra.mxu0 %v280
    %v398 = vpop.f32.mrf.mxu0
    %v399 = vadd.f32 %v307, %v398
    %v400 = vpop.f32.mrf.mxu0
    %v401 = vpop.f32.mrf.mxu0
    %v402 = vadd.f32 %v307, %v401
    %v403 = vpop.f32.mrf.mxu0
    %404 = vmatprep.mubr.bf16.mxu0 0
    %405 = vmatmul.mubr.bf16.gmra.mxu0 %v281
    %v406 = vpop.f32.mrf.mxu0
    %v407 = vadd.f32 %v307, %v406
    %v408 = vpop.f32.mrf.mxu0
    %v409 = vpop.f32.mrf.mxu0
    %v410 = vadd.f32 %v307, %v409
    %v411 = vpop.f32.mrf.mxu0
    %412 = vmatprep.mubr.bf16.mxu0 0
    %413 = vmatmul.mubr.bf16.gmra.mxu0 %v282
    %v414 = vpop.f32.mrf.mxu0
    %v415 = vadd.f32 %v307, %v414
    %v416 = vpop.f32.mrf.mxu0
    %v417 = vpop.f32.mrf.mxu0
    %v418 = vadd.f32 %v307, %v417
    %v419 = vpop.f32.mrf.mxu0
    %420 = vmatprep.mubr.bf16.mxu0 0
    %421 = vmatmul.mubr.bf16.gmra.mxu0 %v283
    %v422 = vpop.f32.mrf.mxu0
    %v423 = vadd.f32 %v307, %v422
    %v424 = vpop.f32.mrf.mxu0
    %v425 = vpop.f32.mrf.mxu0
    %v426 = vadd.f32 %v307, %v425
    %v427 = vpop.f32.mrf.mxu0
    %428 = vmatprep.mubr.bf16.mxu0 0
    %429 = vmatmul.mubr.bf16.gmra.mxu0 %v284
    %v430 = vpop.f32.mrf.mxu0
    %v431 = vadd.f32 %v307, %v430
    %v432 = vpop.f32.mrf.mxu0
    %v433 = vpop.f32.mrf.mxu0
    %v434 = vadd.f32 %v307, %v433
    %v435 = vpop.f32.mrf.mxu0
    %436 = vmatprep.mubr.bf16.mxu0 0
    %437 = vmatmul.mubr.bf16.gmra.mxu0 %v285
    %v438 = vpop.f32.mrf.mxu0
    %v439 = vadd.f32 %v307, %v438
    %v440 = vpop.f32.mrf.mxu0
    %v441 = vpop.f32.mrf.mxu0
    %v442 = vadd.f32 %v307, %v441
    %v443 = vpop.f32.mrf.mxu0
    %444 = vmatprep.mubr.bf16.mxu0 0
    %445 = vmatmul.mubr.bf16.gmra.mxu0 %v286
    %v446 = vpop.f32.mrf.mxu0
    %v447 = vadd.f32 %v307, %v446
    %v448 = vpop.f32.mrf.mxu0
    %v449 = vpop.f32.mrf.mxu0
    %v450 = vadd.f32 %v307, %v449
    %v451 = vpop.f32.mrf.mxu0
    %452 = vdwg.mxu0
    %v453 = vtanh.pop %v391
    %v454 = vtanh.pop %v394
    %v455 = vtanh.pop %v399
    %v456 = vtanh.pop %v402
    %v457 = vtanh.pop %v407
    %v458 = vtanh.pop %v410
    %v459 = vtanh.pop %v415
    %v460 = vtanh.pop %v418
    %v461 = vtanh.pop %v423
    %v462 = vtanh.pop %v426
    %v463 = vtanh.pop %v431
    %v464 = vtanh.pop %v434
    %v465 = vtanh.pop %v439
    %v466 = vtanh.pop %v442
    %v467 = vtanh.pop %v447
    %v468 = vtanh.pop %v450
    %v469 = vpack.c.bf16 %v454, %v453
    %v470 = vpack.c.bf16 %v456, %v455
    %v471 = vpack.c.bf16 %v458, %v457
    %v472 = vpack.c.bf16 %v460, %v459
    %v473 = vpack.c.bf16 %v462, %v461
    %v474 = vpack.c.bf16 %v464, %v463
    %v475 = vpack.c.bf16 %v466, %v465
    %v476 = vpack.c.bf16 %v468, %v467
    %v477 = vld [vmem:[%s1 + $0x88] sm:$0xf]
    %v478 = vld [vmem:[%s1 + $0x8c] sm:$0xf]
    %v479 = vld [vmem:[%s1 + $0x90] sm:$0xf]
    %v480 = vld [vmem:[%s1 + $0x94] sm:$0xf]
    %v481 = vld [vmem:[%s1 + $0x98] sm:$0xf]
    %v482 = vld [vmem:[%s1 + $0x9c] sm:$0xf]
    %v483 = vld [vmem:[%s1 + $0xa0] sm:$0xf]
    %v484 = vld [vmem:[%s1 + $0xa4] sm:$0xf]
    %v485 = vld [vmem:[%s1 + $0xa8] sm:$0xf]
    %v486 = vld [vmem:[%s1 + $0xac] sm:$0xf]
    %v487 = vld [vmem:[%s1 + $0xb0] sm:$0xf]
    %v488 = vld [vmem:[%s1 + $0xb4] sm:$0xf]
    %v489 = vld [vmem:[%s1 + $0xb8] sm:$0xf]
    %v490 = vld [vmem:[%s1 + $0xbc] sm:$0xf]
    %v491 = vld [vmem:[%s1 + $0xc0] sm:$0xf]
    %v492 = vld [vmem:[%s1 + $0xc4] sm:$0xf]
    %v493 = vld [vmem:[%s2 + $0x2] sm:$0x1]
    %v494 = vlaneseq
    %v495 = vshrl.u32 %v494, 7
    %v496 = vsub.s32 0, %v495
    %v497 = vrot.slane %v493, %v496
    %v514 = vunpack.c.l.b16 %v477
    %v515 = vunpack.c.l.b16 %v478
    %v516 = vunpack.c.l.b16 %v479
    %v517 = vunpack.c.l.b16 %v480
    %v518 = vunpack.c.l.b16 %v481
    %v519 = vunpack.c.l.b16 %v482
    %v520 = vunpack.c.l.b16 %v483
    %v521 = vunpack.c.l.b16 %v484
    %v522 = vunpack.c.l.b16 %v485
    %v523 = vunpack.c.l.b16 %v486
    %v524 = vunpack.c.l.b16 %v487
    %v525 = vunpack.c.l.b16 %v488
    %v526 = vunpack.c.l.b16 %v489
    %v527 = vunpack.c.l.b16 %v490
    %v528 = vunpack.c.l.b16 %v491
    %v529 = vunpack.c.l.b16 %v492
    %v530 = vpack.c.b16 %v515, %v514
    %v531 = vpack.c.b16 %v517, %v516
    %v532 = vpack.c.b16 %v519, %v518
    %v533 = vpack.c.b16 %v521, %v520
    %v534 = vpack.c.b16 %v523, %v522
    %v535 = vpack.c.b16 %v525, %v524
    %v536 = vpack.c.b16 %v527, %v526
    %v537 = vpack.c.b16 %v529, %v528
    %546 = vmatprep.subr.bf16.mxu0 0
    %547 = vmatpush1.bf16.msra.mxu0 %v537
    %548 = vmatprep.subr.bf16.mxu0 0
    %549 = vmatpush1.bf16.msra.mxu0 %v536
    %550 = vmatprep.subr.bf16.mxu0 0
    %551 = vmatpush1.bf16.msra.mxu0 %v535
    %552 = vmatprep.subr.bf16.mxu0 0
    %553 = vmatpush1.bf16.msra.mxu0 %v534
    %554 = vmatprep.subr.bf16.mxu0 0
    %555 = vmatpush1.bf16.msra.mxu0 %v533
    %556 = vmatprep.subr.bf16.mxu0 0
    %557 = vmatpush1.bf16.msra.mxu0 %v532
    %558 = vmatprep.subr.bf16.mxu0 0
    %559 = vmatpush1.bf16.msra.mxu0 %v531
    %560 = vmatprep.subr.bf16.mxu0 0
    %561 = vmatpush1.bf16.msra.mxu0 %v530
    %562 = vmatprep.subr.bf16.mxu0 0
    %563 = vmatpush2.bf16.msra.mxu0 0
    %564 = vmatprep.subr.bf16.mxu0 0
    %565 = vmatpush2.bf16.msra.mxu0 0
    %566 = vmatprep.subr.bf16.mxu0 0
    %567 = vmatpush2.bf16.msra.mxu0 0
    %568 = vmatprep.subr.bf16.mxu0 0
    %569 = vmatpush2.bf16.msra.mxu0 0
    %570 = vmatprep.subr.bf16.mxu0 0
    %571 = vmatpush2.bf16.msra.mxu0 0
    %572 = vmatprep.subr.bf16.mxu0 0
    %573 = vmatpush2.bf16.msra.mxu0 0
    %574 = vmatprep.subr.bf16.mxu0 0
    %575 = vmatpush2.bf16.msra.mxu0 0
    %576 = vmatprep.subr.bf16.mxu0 0
    %577 = vmatpush2.bf16.msra.mxu0 0
    %578 = vmatprep.mubr.bf16.mxu0 0
    %579 = vmatmul.mubr.bf16.gmra.mxu0 %v469
    %v580 = vpop.f32.mrf.mxu0
    %v581 = vadd.f32 %v497, %v580
    %v582 = vpop.f32.mrf.mxu0
    %v583 = vpop.f32.mrf.mxu0
    %v584 = vadd.f32 %v497, %v583
    %v585 = vpop.f32.mrf.mxu0
    %586 = vmatprep.mubr.bf16.mxu0 0
    %587 = vmatmul.mubr.bf16.gmra.mxu0 %v470
    %v588 = vpop.f32.mrf.mxu0
    %v589 = vadd.f32 %v497, %v588
    %v590 = vpop.f32.mrf.mxu0
    %v591 = vpop.f32.mrf.mxu0
    %v592 = vadd.f32 %v497, %v591
    %v593 = vpop.f32.mrf.mxu0
    %594 = vmatprep.mubr.bf16.mxu0 0
    %595 = vmatmul.mubr.bf16.gmra.mxu0 %v471
    %v596 = vpop.f32.mrf.mxu0
    %v597 = vadd.f32 %v497, %v596
    %v598 = vpop.f32.mrf.mxu0
    %v599 = vpop.f32.mrf.mxu0
    %v600 = vadd.f32 %v497, %v599
    %v601 = vpop.f32.mrf.mxu0
    %602 = vmatprep.mubr.bf16.mxu0 0
    %603 = vmatmul.mubr.bf16.gmra.mxu0 %v472
    %v604 = vpop.f32.mrf.mxu0
    %v605 = vadd.f32 %v497, %v604
    %v606 = vpop.f32.mrf.mxu0
    %v607 = vpop.f32.mrf.mxu0
    %v608 = vadd.f32 %v497, %v607
    %v609 = vpop.f32.mrf.mxu0
    %610 = vmatprep.mubr.bf16.mxu0 0
    %611 = vmatmul.mubr.bf16.gmra.mxu0 %v473
    %v612 = vpop.f32.mrf.mxu0
    %v613 = vadd.f32 %v497, %v612
    %v614 = vpop.f32.mrf.mxu0
    %v615 = vpop.f32.mrf.mxu0
    %v616 = vadd.f32 %v497, %v615
    %v617 = vpop.f32.mrf.mxu0
    %618 = vmatprep.mubr.bf16.mxu0 0
    %619 = vmatmul.mubr.bf16.gmra.mxu0 %v474
    %v620 = vpop.f32.mrf.mxu0
    %v621 = vadd.f32 %v497, %v620
    %v622 = vpop.f32.mrf.mxu0
    %v623 = vpop.f32.mrf.mxu0
    %v624 = vadd.f32 %v497, %v623
    %v625 = vpop.f32.mrf.mxu0
    %626 = vmatprep.mubr.bf16.mxu0 0
    %627 = vmatmul.mubr.bf16.gmra.mxu0 %v475
    %v628 = vpop.f32.mrf.mxu0
    %v629 = vadd.f32 %v497, %v628
    %v630 = vpop.f32.mrf.mxu0
    %v631 = vpop.f32.mrf.mxu0
    %v632 = vadd.f32 %v497, %v631
    %v633 = vpop.f32.mrf.mxu0
    %634 = vmatprep.mubr.bf16.mxu0 0
    %635 = vmatmul.mubr.bf16.gmra.mxu0 %v476
    %v636 = vpop.f32.mrf.mxu0
    %v637 = vadd.f32 %v497, %v636
    %v638 = vpop.f32.mrf.mxu0
    %v639 = vpop.f32.mrf.mxu0
    %v640 = vadd.f32 %v497, %v639
    %v641 = vpop.f32.mrf.mxu0
    %642 = vdwg.mxu0
    %v643 = vtanh.pop %v581
    %v644 = vtanh.pop %v584
    %v645 = vtanh.pop %v589
    %v646 = vtanh.pop %v592
    %v647 = vtanh.pop %v597
    %v648 = vtanh.pop %v600
    %v649 = vtanh.pop %v605
    %v650 = vtanh.pop %v608
    %v651 = vtanh.pop %v613
    %v652 = vtanh.pop %v616
    %v653 = vtanh.pop %v621
    %v654 = vtanh.pop %v624
    %v655 = vtanh.pop %v629
    %v656 = vtanh.pop %v632
    %v657 = vtanh.pop %v637
    %v658 = vtanh.pop %v640
    %v659 = vpack.c.bf16 %v644, %v643
    %v660 = vpack.c.bf16 %v646, %v645
    %v661 = vpack.c.bf16 %v648, %v647
    %v662 = vpack.c.bf16 %v650, %v649
    %v663 = vpack.c.bf16 %v652, %v651
    %v664 = vpack.c.bf16 %v654, %v653
    %v665 = vpack.c.bf16 %v656, %v655
    %v666 = vpack.c.bf16 %v658, %v657
    %v667 = vld [vmem:[%s1 + $0xc8] sm:$0xf]
    %v668 = vld [vmem:[%s1 + $0xcc] sm:$0xf]
    %v669 = vld [vmem:[%s1 + $0xd0] sm:$0xf]
    %v670 = vld [vmem:[%s1 + $0xd4] sm:$0xf]
    %v671 = vld [vmem:[%s1 + $0xd8] sm:$0xf]
    %v672 = vld [vmem:[%s1 + $0xdc] sm:$0xf]
    %v673 = vld [vmem:[%s1 + $0xe0] sm:$0xf]
    %v674 = vld [vmem:[%s1 + $0xe4] sm:$0xf]
    %v675 = vld [vmem:[%s1 + $0xe8] sm:$0xf]
    %v676 = vld [vmem:[%s1 + $0xec] sm:$0xf]
    %v677 = vld [vmem:[%s1 + $0xf0] sm:$0xf]
    %v678 = vld [vmem:[%s1 + $0xf4] sm:$0xf]
    %v679 = vld [vmem:[%s1 + $0xf8] sm:$0xf]
    %v680 = vld [vmem:[%s1 + $0xfc] sm:$0xf]
    %v681 = vld [vmem:[%s1 + $0x100] sm:$0xf]
    %v682 = vld [vmem:[%s1 + $0x104] sm:$0xf]
    %v683 = vld [vmem:[%s2 + $0x3] sm:$0x1]
    %v684 = vlaneseq
    %v685 = vshrl.u32 %v684, 7
    %v686 = vsub.s32 0, %v685
    %v687 = vrot.slane %v683, %v686
    %v704 = vunpack.c.l.b16 %v667
    %v705 = vunpack.c.l.b16 %v668
    %v706 = vunpack.c.l.b16 %v669
    %v707 = vunpack.c.l.b16 %v670
    %v708 = vunpack.c.l.b16 %v671
    %v709 = vunpack.c.l.b16 %v672
    %v710 = vunpack.c.l.b16 %v673
    %v711 = vunpack.c.l.b16 %v674
    %v712 = vunpack.c.l.b16 %v675
    %v713 = vunpack.c.l.b16 %v676
    %v714 = vunpack.c.l.b16 %v677
    %v715 = vunpack.c.l.b16 %v678
    %v716 = vunpack.c.l.b16 %v679
    %v717 = vunpack.c.l.b16 %v680
    %v718 = vunpack.c.l.b16 %v681
    %v719 = vunpack.c.l.b16 %v682
    %v720 = vpack.c.b16 %v705, %v704
    %v721 = vpack.c.b16 %v707, %v706
    %v722 = vpack.c.b16 %v709, %v708
    %v723 = vpack.c.b16 %v711, %v710
    %v724 = vpack.c.b16 %v713, %v712
    %v725 = vpack.c.b16 %v715, %v714
    %v726 = vpack.c.b16 %v717, %v716
    %v727 = vpack.c.b16 %v719, %v718
    %736 = vmatprep.subr.bf16.mxu0 0
    %737 = vmatpush1.bf16.msra.mxu0 %v727
    %738 = vmatprep.subr.bf16.mxu0 0
    %739 = vmatpush1.bf16.msra.mxu0 %v726
    %740 = vmatprep.subr.bf16.mxu0 0
    %741 = vmatpush1.bf16.msra.mxu0 %v725
    %742 = vmatprep.subr.bf16.mxu0 0
    %743 = vmatpush1.bf16.msra.mxu0 %v724
    %744 = vmatprep.subr.bf16.mxu0 0
    %745 = vmatpush1.bf16.msra.mxu0 %v723
    %746 = vmatprep.subr.bf16.mxu0 0
    %747 = vmatpush1.bf16.msra.mxu0 %v722
    %748 = vmatprep.subr.bf16.mxu0 0
    %749 = vmatpush1.bf16.msra.mxu0 %v721
    %750 = vmatprep.subr.bf16.mxu0 0
    %751 = vmatpush1.bf16.msra.mxu0 %v720
    %752 = vmatprep.subr.bf16.mxu0 0
    %753 = vmatpush2.bf16.msra.mxu0 0
    %754 = vmatprep.subr.bf16.mxu0 0
    %755 = vmatpush2.bf16.msra.mxu0 0
    %756 = vmatprep.subr.bf16.mxu0 0
    %757 = vmatpush2.bf16.msra.mxu0 0
    %758 = vmatprep.subr.bf16.mxu0 0
    %759 = vmatpush2.bf16.msra.mxu0 0
    %760 = vmatprep.subr.bf16.mxu0 0
    %761 = vmatpush2.bf16.msra.mxu0 0
    %762 = vmatprep.subr.bf16.mxu0 0
    %763 = vmatpush2.bf16.msra.mxu0 0
    %764 = vmatprep.subr.bf16.mxu0 0
    %765 = vmatpush2.bf16.msra.mxu0 0
    %766 = vmatprep.subr.bf16.mxu0 0
    %767 = vmatpush2.bf16.msra.mxu0 0
    %768 = vmatprep.mubr.bf16.mxu0 0
    %769 = vmatmul.mubr.bf16.gmra.mxu0 %v659
    %v770 = vpop.f32.mrf.mxu0
    %v771 = vadd.f32 %v687, %v770
    %v772 = vpop.f32.mrf.mxu0
    %v773 = vpop.f32.mrf.mxu0
    %v774 = vadd.f32 %v687, %v773
    %v775 = vpop.f32.mrf.mxu0
    %776 = vmatprep.mubr.bf16.mxu0 0
    %777 = vmatmul.mubr.bf16.gmra.mxu0 %v660
    %v778 = vpop.f32.mrf.mxu0
    %v779 = vadd.f32 %v687, %v778
    %v780 = vpop.f32.mrf.mxu0
    %v781 = vpop.f32.mrf.mxu0
    %v782 = vadd.f32 %v687, %v781
    %v783 = vpop.f32.mrf.mxu0
    %784 = vmatprep.mubr.bf16.mxu0 0
    %785 = vmatmul.mubr.bf16.gmra.mxu0 %v661
    %v786 = vpop.f32.mrf.mxu0
    %v787 = vadd.f32 %v687, %v786
    %v788 = vpop.f32.mrf.mxu0
    %v789 = vpop.f32.mrf.mxu0
    %v790 = vadd.f32 %v687, %v789
    %v791 = vpop.f32.mrf.mxu0
    %792 = vmatprep.mubr.bf16.mxu0 0
    %793 = vmatmul.mubr.bf16.gmra.mxu0 %v662
    %v794 = vpop.f32.mrf.mxu0
    %v795 = vadd.f32 %v687, %v794
    %v796 = vpop.f32.mrf.mxu0
    %v797 = vpop.f32.mrf.mxu0
    %v798 = vadd.f32 %v687, %v797
    %v799 = vpop.f32.mrf.mxu0
    %800 = vmatprep.mubr.bf16.mxu0 0
    %801 = vmatmul.mubr.bf16.gmra.mxu0 %v663
    %v802 = vpop.f32.mrf.mxu0
    %v803 = vadd.f32 %v687, %v802
    %v804 = vpop.f32.mrf.mxu0
    %v805 = vpop.f32.mrf.mxu0
    %v806 = vadd.f32 %v687, %v805
    %v807 = vpop.f32.mrf.mxu0
    %808 = vmatprep.mubr.bf16.mxu0 0
    %809 = vmatmul.mubr.bf16.gmra.mxu0 %v664
    %v810 = vpop.f32.mrf.mxu0
    %v811 = vadd.f32 %v687, %v810
    %v812 = vpop.f32.mrf.mxu0
    %v813 = vpop.f32.mrf.mxu0
    %v814 = vadd.f32 %v687, %v813
    %v815 = vpop.f32.mrf.mxu0
    %816 = vmatprep.mubr.bf16.mxu0 0
    %817 = vmatmul.mubr.bf16.gmra.mxu0 %v665
    %v818 = vpop.f32.mrf.mxu0
    %v819 = vadd.f32 %v687, %v818
    %v820 = vpop.f32.mrf.mxu0
    %v821 = vpop.f32.mrf.mxu0
    %v822 = vadd.f32 %v687, %v821
    %v823 = vpop.f32.mrf.mxu0
    %824 = vmatprep.mubr.bf16.mxu0 0
    %825 = vmatmul.mubr.bf16.gmra.mxu0 %v666
    %v826 = vpop.f32.mrf.mxu0
    %v827 = vadd.f32 %v687, %v826
    %v828 = vpop.f32.mrf.mxu0
    %v829 = vpop.f32.mrf.mxu0
    %v830 = vadd.f32 %v687, %v829
    %v831 = vpop.f32.mrf.mxu0
    %832 = vdwg.mxu0
    %v833 = vtanh.pop %v771
    %v834 = vtanh.pop %v774
    %v835 = vtanh.pop %v779
    %v836 = vtanh.pop %v782
    %v837 = vtanh.pop %v787
    %v838 = vtanh.pop %v790
    %v839 = vtanh.pop %v795
    %v840 = vtanh.pop %v798
    %v841 = vtanh.pop %v803
    %v842 = vtanh.pop %v806
    %v843 = vtanh.pop %v811
    %v844 = vtanh.pop %v814
    %v845 = vtanh.pop %v819
    %v846 = vtanh.pop %v822
    %v847 = vtanh.pop %v827
    %v848 = vtanh.pop %v830
    %v849 = vpack.c.bf16 %v834, %v833
    %v850 = vpack.c.bf16 %v836, %v835
    %v851 = vpack.c.bf16 %v838, %v837
    %v852 = vpack.c.bf16 %v840, %v839
    %v853 = vpack.c.bf16 %v842, %v841
    %v854 = vpack.c.bf16 %v844, %v843
    %v855 = vpack.c.bf16 %v846, %v845
    %v856 = vpack.c.bf16 %v848, %v847
    %v857 = vld [vmem:[%s1 + $0x108] sm:$0x1]
    %v858 = vld [vmem:[%s2 + $0x4] sm:$0x1]
    %860 = vset.pattern.permute.xlu0 0
    %861 = vperm.xlu0 %860, %v858
    %v862 = vpop.permute.xlu0 %861
    %864 = vmatprep.subr.bf16.mxu0 0
    %865 = vmatpush1.bf16.xpose.msra.mxu0 %v856
    %866 = vmatprep.subr.bf16.mxu0 0
    %867 = vmatpush1.bf16.xpose.msra.mxu0 %v855
    %868 = vmatprep.subr.bf16.mxu0 0
    %869 = vmatpush1.bf16.xpose.msra.mxu0 %v854
    %870 = vmatprep.subr.bf16.mxu0 0
    %871 = vmatpush1.bf16.xpose.msra.mxu0 %v853
    %872 = vmatprep.subr.bf16.mxu0 0
    %873 = vmatpush1.bf16.xpose.msra.mxu0 %v852
    %874 = vmatprep.subr.bf16.mxu0 0
    %875 = vmatpush1.bf16.xpose.msra.mxu0 %v851
    %876 = vmatprep.subr.bf16.mxu0 0
    %877 = vmatpush1.bf16.xpose.msra.mxu0 %v850
    %878 = vmatprep.subr.bf16.mxu0 0
    %879 = vmatpush1.bf16.xpose.msra.mxu0 %v849
    %880 = vmatprep.subr.bf16.mxu0 0
    %881 = vmatpush2.bf16.xpose.msra.mxu0 0
    %882 = vmatprep.subr.bf16.mxu0 0
    %883 = vmatpush2.bf16.xpose.msra.mxu0 0
    %884 = vmatprep.subr.bf16.mxu0 0
    %885 = vmatpush2.bf16.xpose.msra.mxu0 0
    %886 = vmatprep.subr.bf16.mxu0 0
    %887 = vmatpush2.bf16.xpose.msra.mxu0 0
    %888 = vmatprep.subr.bf16.mxu0 0
    %889 = vmatpush2.bf16.xpose.msra.mxu0 0
    %890 = vmatprep.subr.bf16.mxu0 0
    %891 = vmatpush2.bf16.xpose.msra.mxu0 0
    %892 = vmatprep.subr.bf16.mxu0 0
    %893 = vmatpush2.bf16.xpose.msra.mxu0 0
    %894 = vmatprep.subr.bf16.mxu0 0
    %895 = vmatpush2.bf16.xpose.msra.mxu0 0
    %896 = vmatprep.mubr.bf16.mxu0 0
    %897 = vmatmul.mubr.bf16.gmra.mxu0 %v857
    %v898 = vpop.f32.mrf.mxu0
    %v899 = vadd.f32 %v862, %v898
    %v900 = vpop.f32.mrf.mxu0
    %v901 = vpop.f32.mrf.mxu0
    %v902 = vpop.f32.mrf.mxu0
    %903 = vdwg.mxu0
    %904 = vst [vmem:[#allocation2] sm:$0x1] %v899
    // Predicated region
    $region14: #{tpu_custom_call.1} parent=1 // pred_check
      _
    $region15: #{tpu_custom_call.1} parent=1 // pred_check_branch
      %906 = sbr.rel (0) target = $region17
    $region16: #{tpu_custom_call.1} parent=1 // pred_region
      %s908 = ssub.s32 16, 16
      %909 = vsyncadd [#allocation3], %s908
      %s911 = sshll.u32 [#allocation2], 4
      %s912 = int_to_ptr.vmem [resolvable:$true] %s911
      %914 = dma.vmem_to_hbm [thread:$0]  %s912, 16, %s3, [#allocation3]
    $region17: #{tpu_custom_call.1} parent=1 // pred_fallthru
      _
    // Predicated region
    $region18: #{tpu_custom_call.1} parent=1 // pred_check
      _
    $region19: #{tpu_custom_call.1} parent=1 // pred_check_branch
      %916 = sbr.rel (0) target = $region21
    $region20: #{tpu_custom_call.1} parent=1 // pred_region
      %917 = dma.done [#allocation3], 16
    $region21: #{tpu_custom_call.1} parent=1 // pred_fallthru
      _
    %918 = vsyncpa [#allocation3], 1

</llo_original>
